<compile_context>
chip_gen: v6e
topology: v6e:2x2x1
jax: 0.10.0
libtpu: 0.0.40
codegen_flags: <defaults>
</compile_context>

<pallas_src>
import jax
import jax.numpy as jnp
from jax.experimental import pallas as pl
from jax.experimental.pallas import tpu as pltpu


# ----------------------------------------------------------------------------
# Fused kernel: graph hops + decomposed 1x1 conv for one (sample, L-tile) block
# ----------------------------------------------------------------------------
def _make_gcn_kernel(n_supports, order):
    def kernel(*refs):
        x_ref = refs[0]                      # (1, V, Mt)   Mt = l_tile * C
        a_refs = refs[1:1 + n_supports]      # each (1, V, V), pre-transposed
        wexp_ref = refs[1 + n_supports]      # (n_hops, Mt, Pt)  Pt = l_tile * C_out
        bias_ref = refs[2 + n_supports]      # (1, Pt)
        o_ref = refs[3 + n_supports]         # (1, V, Pt)

        x = x_ref[0]                         # (V, Mt)

        # hop 0 (identity hop) contribution of the decomposed 1x1 conv
        acc = jnp.dot(x, wexp_ref[0], preferred_element_type=jnp.float32)

        k = 1
        for s in range(n_supports):
            a_t = a_refs[s][0]               # (V, V); a_t[w, v] = A[v, w]
            h = x
            for _ in range(order):
                # graph propagation: h_new[w, m] = sum_v A[v, w] * h[v, m]
                h = jnp.dot(a_t, h, preferred_element_type=jnp.float32)
                # accumulate this hop's slice of the 1x1 conv
                acc = acc + jnp.dot(h, wexp_ref[k],
                                    preferred_element_type=jnp.float32)
                k += 1

        o_ref[0] = (acc + bias_ref[...]).astype(o_ref.dtype)

    return kernel


# ----------------------------------------------------------------------------
# gcn forward (layout plumbing in plain JAX, everything hot in one Pallas call)
# ----------------------------------------------------------------------------
def gcn_forward(x, supports, W, bias, order=2, l_tile=None):
    """x: (N, C, V, L); supports: list of (V,V) or (N,V,V);
    W: (C_out, C_total) with C_total = (order*len(supports)+1)*C; bias: (C_out,)."""
    N, C, V, L = x.shape
    C_out, C_total = W.shape
    n_supports = len(supports)
    n_hops = 1 + n_supports * order
    assert C_total == n_hops * C, (C_total, n_hops, C)

    if l_tile is None:
        l_tile = L                      # demo shapes: one L-tile per sample
    assert L % l_tile == 0, "l_tile must divide L"
    n_lt = L // l_tile
    Mt = l_tile * C
    Pt = l_tile * C_out

    # node-major, lane-dense layout: x_in[n, v, l*C + c] = x[n, c, v, l]
    x_in = jnp.transpose(x, (0, 2, 3, 1)).reshape(N, V, L * C)

    # adjacencies, transposed on the host so the kernel never transposes
    a_inputs, a_specs = [], []
    for a in supports:
        if a.ndim == 2:
            a_inputs.append(a.T[None, :, :])                       # (1, V, V)
            a_specs.append(pl.BlockSpec((1, V, V), lambda b, t: (0, 0, 0)))
        elif a.ndim == 3:
            a_inputs.append(jnp.transpose(a, (0, 2, 1)))           # (N, V, V)
            a_specs.append(pl.BlockSpec((1, V, V), lambda b, t: (b, 0, 0)))
        else:
            raise NotImplementedError(
                "GConv not implemented for adj of dimension " + str(a.ndim))

    # block-diagonal (over the L-tile) expansion of each hop's slice of W:
    #   Wk_exp[l*C + c, l*C_out + o] = W[o, k*C + c]
    eye_l = jnp.eye(l_tile, dtype=W.dtype)
    w_exp = jnp.stack(
        [jnp.kron(eye_l, W[:, k * C:(k + 1) * C].T) for k in range(n_hops)]
    )                                                              # (n_hops, Mt, Pt)
    bias_t = jnp.tile(bias, l_tile).reshape(1, Pt)                 # (1, Pt)

    kernel = _make_gcn_kernel(n_supports, order)

    out_flat = pl.pallas_call(
        kernel,
        out_shape=jax.ShapeDtypeStruct((N, V, L * C_out), x.dtype),
        grid=(N, n_lt),
        in_specs=(
            [pl.BlockSpec((1, V, Mt), lambda b, t: (b, 0, t))]
            + a_specs
            + [pl.BlockSpec((n_hops, Mt, Pt), lambda b, t: (0, 0, 0)),
               pl.BlockSpec((1, Pt), lambda b, t: (0, 0))]
        ),
        out_specs=pl.BlockSpec((1, V, Pt), lambda b, t: (b, 0, t)),
        compiler_params=pltpu.CompilerParams(
            dimension_semantics=("parallel", "parallel")),
    )(x_in, *a_inputs, w_exp, bias_t)

    # (N, V, L*C_out) -> (N, C_out, V, L)
    out = out_flat.reshape(N, V, L, C_out).transpose(0, 3, 1, 2)
    # TODO(synk): F.dropout(training=True) RNG masking not implemented; identity here.
    return out


# ----------------------------------------------------------------------------
# Pure-JAX reference for verification
# ----------------------------------------------------------------------------
def gcn_reference(x, supports, W, bias, order=2):
    prec = jax.lax.Precision.HIGHEST

    def prop(xi, a):
        if a.ndim == 2:
            return jnp.einsum('ncvl,vw->ncwl', xi, a, precision=prec)
        return jnp.einsum('ncvl,nvw->ncwl', xi, a, precision=prec)

    out = [x]
    for a in supports:
        x1 = prop(x, a)
        out.append(x1)
        for _ in range(2, order + 1):
            x2 = prop(x1, a)
            out.append(x2)
            x1 = x2
    h = jnp.concatenate(out, axis=1)
    return (jnp.einsum('oc,ncvl->novl', W, h, precision=prec)
            + bias[None, :, None, None])


# ----------------------------------------------------------------------------
if __name__ == "__main__":
    key = jax.random.PRNGKey(0)
    k_x, k_a1, k_a2, k_w, k_b = jax.random.split(key, 5)

    # Small shapes consistent with the module:
    N, C_in, V, L = 2, 4, 16, 8          # batch, channels, num_nodes, seq_len
    support_len, order = 2, 2
    C_out = 8
    C_total = (order * support_len + 1) * C_in   # 20

    x = jax.random.normal(k_x, (N, C_in, V, L), dtype=jnp.float32)
    # one shared (V,V) adjacency and one per-sample (N,V,V) adjacency
    A1 = jax.nn.softmax(jax.random.normal(k_a1, (V, V), dtype=jnp.float32), axis=-1)
    A2 = jax.nn.softmax(jax.random.normal(k_a2, (N, V, V), dtype=jnp.float32), axis=-1)
    supports = [A1, A2]

    # Deterministic 1x1 Conv2d parameters: weight (C_out, C_total), bias (C_out,)
    W = 0.1 * jax.random.normal(k_w, (C_out, C_total), dtype=jnp.float32)
    bias = 0.1 * jax.random.normal(k_b, (C_out,), dtype=jnp.float32)

    out = gcn_forward(x, supports, W, bias, order=order)
    out = jax.block_until_ready(out)

    ref = gcn_reference(x, supports, W, bias, order=order)
    assert out.shape == (N, C_out, V, L), out.shape
    assert jnp.allclose(out, ref, atol=1e-4, rtol=1e-4), \
        f"max abs err {jnp.max(jnp.abs(out - ref))}"

    print("KERNEL_OK")
</pallas_src>

<mosaic_0001>
module attributes {stable_mosaic.version = 11 : i64} {
  func.func @kernel(%arg0: i32, %arg1: i32, %arg2: memref<1x16x32xf32, #tpu.memory_space<vmem>>, %arg3: memref<1x16x16xf32, #tpu.memory_space<vmem>>, %arg4: memref<1x16x16xf32, #tpu.memory_space<vmem>>, %arg5: memref<5x32x64xf32, #tpu.memory_space<vmem>>, %arg6: memref<1x64xf32, #tpu.memory_space<vmem>>, %arg7: memref<1x16x64xf32, #tpu.memory_space<vmem>>) attributes {dimension_semantics = [#tpu.dimension_semantics<parallel>, #tpu.dimension_semantics<parallel>], iteration_bounds = array<i64: 2, 1>, scalar_prefetch = 0 : i64, scratch_operands = 0 : i64, tpu.core_type = #tpu.core_type<tc>, window_params = [{transform_indices = @transform_0, window_bounds = array<i64: 1, 16, 32>}, {pipeline_mode = #tpu.pipeline_mode<synchronous>, transform_indices = @transform_1, window_bounds = array<i64: 1, 16, 16>}, {transform_indices = @transform_2, window_bounds = array<i64: 1, 16, 16>}, {pipeline_mode = #tpu.pipeline_mode<synchronous>, transform_indices = @transform_3, window_bounds = array<i64: 5, 32, 64>}, {pipeline_mode = #tpu.pipeline_mode<synchronous>, transform_indices = @transform_4, window_bounds = array<i64: 1, 64>}, {transform_indices = @transform_5, window_bounds = array<i64: 1, 16, 64>}]} {
    %c0 = arith.constant 0 : index
    %c0_0 = arith.constant 0 : index
    %c0_1 = arith.constant 0 : index
    %0 = vector.load %arg2[%c0, %c0_0, %c0_1] : memref<1x16x32xf32, #tpu.memory_space<vmem>>, vector<1x16x32xf32>
    %1 = vector.shape_cast %0 : vector<1x16x32xf32> to vector<16x32xf32>
    %c0_2 = arith.constant 0 : index
    %c0_3 = arith.constant 0 : index
    %c0_4 = arith.constant 0 : index
    %2 = vector.load %arg5[%c0_2, %c0_3, %c0_4] : memref<5x32x64xf32, #tpu.memory_space<vmem>>, vector<1x32x64xf32>
    %3 = vector.shape_cast %2 : vector<1x32x64xf32> to vector<32x64xf32>
    %cst = arith.constant dense<0.000000e+00> : vector<16x64xf32>
    %4 = tpu.matmul %1, %3, %cst {dimension_numbers = #tpu.dot_dimension_numbers<[1], [0], [0], [1], [0, 0, 1, 1], [], []>} : vector<16x32xf32>, vector<32x64xf32>, vector<16x64xf32> -> vector<16x64xf32>
    %c0_5 = arith.constant 0 : index
    %c0_6 = arith.constant 0 : index
    %c0_7 = arith.constant 0 : index
    %5 = vector.load %arg3[%c0_5, %c0_6, %c0_7] : memref<1x16x16xf32, #tpu.memory_space<vmem>>, vector<1x16x16xf32>
    %6 = vector.shape_cast %5 : vector<1x16x16xf32> to vector<16x16xf32>
    %cst_8 = arith.constant dense<0.000000e+00> : vector<16x32xf32>
    %7 = tpu.matmul %6, %1, %cst_8 {dimension_numbers = #tpu.dot_dimension_numbers<[1], [0], [0], [1], [0, 0, 1, 1], [], []>} : vector<16x16xf32>, vector<16x32xf32>, vector<16x32xf32> -> vector<16x32xf32>
    %c1 = arith.constant 1 : index
    %c0_9 = arith.constant 0 : index
    %c0_10 = arith.constant 0 : index
    %8 = vector.load %arg5[%c1, %c0_9, %c0_10] : memref<5x32x64xf32, #tpu.memory_space<vmem>>, vector<1x32x64xf32>
    %9 = vector.shape_cast %8 : vector<1x32x64xf32> to vector<32x64xf32>
    %cst_11 = arith.constant dense<0.000000e+00> : vector<16x64xf32>
    %10 = tpu.matmul %7, %9, %cst_11 {dimension_numbers = #tpu.dot_dimension_numbers<[1], [0], [0], [1], [0, 0, 1, 1], [], []>} : vector<16x32xf32>, vector<32x64xf32>, vector<16x64xf32> -> vector<16x64xf32>
    %11 = arith.addf %4, %10 : vector<16x64xf32>
    %cst_12 = arith.constant dense<0.000000e+00> : vector<16x32xf32>
    %12 = tpu.matmul %6, %7, %cst_12 {dimension_numbers = #tpu.dot_dimension_numbers<[1], [0], [0], [1], [0, 0, 1, 1], [], []>} : vector<16x16xf32>, vector<16x32xf32>, vector<16x32xf32> -> vector<16x32xf32>
    %c2 = arith.constant 2 : index
    %c0_13 = arith.constant 0 : index
    %c0_14 = arith.constant 0 : index
    %13 = vector.load %arg5[%c2, %c0_13, %c0_14] : memref<5x32x64xf32, #tpu.memory_space<vmem>>, vector<1x32x64xf32>
    %14 = vector.shape_cast %13 : vector<1x32x64xf32> to vector<32x64xf32>
    %cst_15 = arith.constant dense<0.000000e+00> : vector<16x64xf32>
    %15 = tpu.matmul %12, %14, %cst_15 {dimension_numbers = #tpu.dot_dimension_numbers<[1], [0], [0], [1], [0, 0, 1, 1], [], []>} : vector<16x32xf32>, vector<32x64xf32>, vector<16x64xf32> -> vector<16x64xf32>
    %16 = arith.addf %11, %15 : vector<16x64xf32>
    %c0_16 = arith.constant 0 : index
    %c0_17 = arith.constant 0 : index
    %c0_18 = arith.constant 0 : index
    %17 = vector.load %arg4[%c0_16, %c0_17, %c0_18] : memref<1x16x16xf32, #tpu.memory_space<vmem>>, vector<1x16x16xf32>
    %18 = vector.shape_cast %17 : vector<1x16x16xf32> to vector<16x16xf32>
    %cst_19 = arith.constant dense<0.000000e+00> : vector<16x32xf32>
    %19 = tpu.matmul %18, %1, %cst_19 {dimension_numbers = #tpu.dot_dimension_numbers<[1], [0], [0], [1], [0, 0, 1, 1], [], []>} : vector<16x16xf32>, vector<16x32xf32>, vector<16x32xf32> -> vector<16x32xf32>
    %c3 = arith.constant 3 : index
    %c0_20 = arith.constant 0 : index
    %c0_21 = arith.constant 0 : index
    %20 = vector.load %arg5[%c3, %c0_20, %c0_21] : memref<5x32x64xf32, #tpu.memory_space<vmem>>, vector<1x32x64xf32>
    %21 = vector.shape_cast %20 : vector<1x32x64xf32> to vector<32x64xf32>
    %cst_22 = arith.constant dense<0.000000e+00> : vector<16x64xf32>
    %22 = tpu.matmul %19, %21, %cst_22 {dimension_numbers = #tpu.dot_dimension_numbers<[1], [0], [0], [1], [0, 0, 1, 1], [], []>} : vector<16x32xf32>, vector<32x64xf32>, vector<16x64xf32> -> vector<16x64xf32>
    %23 = arith.addf %16, %22 : vector<16x64xf32>
    %cst_23 = arith.constant dense<0.000000e+00> : vector<16x32xf32>
    %24 = tpu.matmul %18, %19, %cst_23 {dimension_numbers = #tpu.dot_dimension_numbers<[1], [0], [0], [1], [0, 0, 1, 1], [], []>} : vector<16x16xf32>, vector<16x32xf32>, vector<16x32xf32> -> vector<16x32xf32>
    %c4 = arith.constant 4 : index
    %c0_24 = arith.constant 0 : index
    %c0_25 = arith.constant 0 : index
    %25 = vector.load %arg5[%c4, %c0_24, %c0_25] : memref<5x32x64xf32, #tpu.memory_space<vmem>>, vector<1x32x64xf32>
    %26 = vector.shape_cast %25 : vector<1x32x64xf32> to vector<32x64xf32>
    %cst_26 = arith.constant dense<0.000000e+00> : vector<16x64xf32>
    %27 = tpu.matmul %24, %26, %cst_26 {dimension_numbers = #tpu.dot_dimension_numbers<[1], [0], [0], [1], [0, 0, 1, 1], [], []>} : vector<16x32xf32>, vector<32x64xf32>, vector<16x64xf32> -> vector<16x64xf32>
    %28 = arith.addf %23, %27 : vector<16x64xf32>
    %c0_27 = arith.constant 0 : index
    %c0_28 = arith.constant 0 : index
    %29 = vector.load %arg6[%c0_27, %c0_28] : memref<1x64xf32, #tpu.memory_space<vmem>>, vector<1x64xf32>
    %30 = vector.broadcast %29 : vector<1x64xf32> to vector<16x64xf32>
    %31 = arith.addf %28, %30 : vector<16x64xf32>
    %c0_29 = arith.constant 0 : index
    %c0_30 = arith.constant 0 : index
    %c0_31 = arith.constant 0 : index
    %32 = vector.load %arg7[%c0_29, %c0_30, %c0_31] : memref<1x16x64xf32, #tpu.memory_space<vmem>>, vector<1x16x64xf32>
    %33 = vector.shape_cast %32 : vector<1x16x64xf32> to vector<16x64xf32>
    %34 = vector.shape_cast %31 : vector<16x64xf32> to vector<1x16x64xf32>
    tpu.vector_store %arg7[%c0_29, %c0_30, %c0_31], %34 {strides = array<i32>} : memref<1x16x64xf32, #tpu.memory_space<vmem>>, vector<1x16x64xf32>,
    return
  }
  func.func @transform_0(%arg0: i32, %arg1: i32) -> (i32, i32, i32) {
    %c0_i32 = arith.constant 0 : i32
    %c0_i32_0 = arith.constant 0 : i32
    return %arg0, %c0_i32, %arg1 : i32, i32, i32
  }
  func.func @transform_1(%arg0: i32, %arg1: i32) -> (i32, i32, i32) {
    %c0_i32 = arith.constant 0 : i32
    %c0_i32_0 = arith.constant 0 : i32
    %c0_i32_1 = arith.constant 0 : i32
    %c0_i32_2 = arith.constant 0 : i32
    return %c0_i32, %c0_i32_0, %c0_i32_1 : i32, i32, i32
  }
  func.func @transform_2(%arg0: i32, %arg1: i32) -> (i32, i32, i32) {
    %c0_i32 = arith.constant 0 : i32
    %c0_i32_0 = arith.constant 0 : i32
    %c0_i32_1 = arith.constant 0 : i32
    return %arg0, %c0_i32, %c0_i32_0 : i32, i32, i32
  }
  func.func @transform_3(%arg0: i32, %arg1: i32) -> (i32, i32, i32) {
    %c0_i32 = arith.constant 0 : i32
    %c0_i32_0 = arith.constant 0 : i32
    %c0_i32_1 = arith.constant 0 : i32
    %c0_i32_2 = arith.constant 0 : i32
    return %c0_i32, %c0_i32_0, %c0_i32_1 : i32, i32, i32
  }
  func.func @transform_4(%arg0: i32, %arg1: i32) -> (i32, i32) {
    %c0_i32 = arith.constant 0 : i32
    %c0_i32_0 = arith.constant 0 : i32
    %c0_i32_1 = arith.constant 0 : i32
    return %c0_i32, %c0_i32_0 : i32, i32
  }
  func.func @transform_5(%arg0: i32, %arg1: i32) -> (i32, i32, i32) {
    %c0_i32 = arith.constant 0 : i32
    %c0_i32_0 = arith.constant 0 : i32
    return %arg0, %c0_i32, %arg1 : i32, i32, i32
  }
}

</mosaic_0001>

<llo_original>
// kernel: tpu_custom_call.1
$region0: #{tpu_custom_call.1}
  #allocation0 [shape = 'u32[]', space=smem, size = 0x4, offset = 0x4, fixed_abs, tag = 'smem constant byte address 0x4 - core index']
  #allocation1 [shape = 'u32[144,128]{1,0:T(1,128)}', space=vmem, size = 0x12000, scoped, tag = 'internal scratch']
  %s0 = inlined_call_operand.hbm [shape: f32[2,16,32], index: 0, kind: input, shape index: {}]
  %s1 = inlined_call_operand.hbm [shape: f32[1,16,16], index: 1, kind: input, shape index: {}]
  %s2 = inlined_call_operand.hbm [shape: f32[2,16,16], index: 2, kind: input, shape index: {}]
  %s3 = inlined_call_operand.hbm [shape: f32[5,32,64], index: 3, kind: input, shape index: {}]
  %s4 = inlined_call_operand.vmem [shape: f32[1,64], index: 4, kind: input, shape index: {}]
  %s5 = inlined_call_operand.hbm [shape: f32[2,16,64], index: 5, kind: output, shape index: {}]
  %s6 = sld [smem:[#allocation0]]
  $region69: #{tpu_custom_call.1} parent=0
    _
  %s8 = ssub.s32 1, %s6
  %s9 = scalar_select 0, %s8, %s6
  $region1: #{tpu_custom_call.1} parent=0
    #allocation2 [shape = 'u8[16384]{0}', space=vmem, size = 0x4000, scoped, tag = 'input window, operand 0']
    #allocation3 [shape = 's32[2]{0}', space=sflag, size = 0x8, scoped, tag = 'scoped memory for tpu_custom_call.1']
    #allocation4 [shape = 's32[2]{0}', space=sflag, size = 0x8, scoped, tag = 'scoped memory for tpu_custom_call.1']
    #allocation5 [shape = 'u8[8192]{0}', space=vmem, size = 0x2000, scoped, tag = 'input window, operand 1, single buffered']
    #allocation6 [shape = 's32[1]{0}', space=sflag, size = 0x4, scoped, tag = 'scoped memory for tpu_custom_call.1']
    #allocation7 [shape = 'u8[16384]{0}', space=vmem, size = 0x4000, scoped, tag = 'input window, operand 2']
    #allocation8 [shape = 'u8[81920]{0}', space=vmem, size = 0x14000, scoped, tag = 'input window, operand 3, single buffered']
    #allocation9 [shape = 'u8[16384]{0}', space=vmem, size = 0x4000, scoped, tag = 'output window, operand 0']
    %10 = vsyncpa [#allocation3], 0
    %s11 = scalar_lea.sflag [#allocation3], 1
    %12 = vsyncpa %s11, 0
    %13 = vsyncpa [#allocation6], 0
    %14 = vsyncpa [#allocation4], 0
    %s15 = scalar_lea.sflag [#allocation4], 1
    %16 = vsyncpa %s15, 0
    loop: start=0, step=1, limit=4
    $region2: #{tpu_custom_call.1} parent=1 // loop_pre_header
      _
    $region3: #{tpu_custom_call.1} parent=1 // loop_header
      %s18 = sphi 0, %s22
      %p19 = scmp.ge.s32.totalorder %s18, 4
      %s25 = sphi 0, %s37
      %s26 = sphi 0, %s33
      %s27 = sphi 0, %s25
      %s28 = sphi 0, %s26
      %s29 = sphi 0, %s27
      %s30 = sphi 0, %s28
      %s42 = sphi 0, %s44
      %s45 = sphi 0, %s42
      %s46 = sphi 0, %s45
      %s62 = sphi 0, %s46
      %s66 = sphi 0, %s66
      %s68 = sphi 0, %s66
      %s69 = sphi 0, %s68
      %s83 = sphi 0, %s69
      %s89 = sphi 0, %s91
      %s92 = sphi 0, %s89
      %s93 = sphi 0, %s92
      %s109 = sphi 0, %s93
      %s113 = sphi 0, %s113
      %s115 = sphi 0, %s113
      %s116 = sphi 0, %s115
      %s130 = sphi 0, %s116
      %s134 = sphi 0, %s134
      %s136 = sphi 0, %s134
      %s137 = sphi 0, %s136
      %s151 = sphi 0, %s137
      %s159 = sphi 0, %s161
      %s162 = sphi 0, %s159
      %s163 = sphi 0, %s162
      %s179 = sphi 0, %s163
    $region4: #{tpu_custom_call.1} parent=1 // loop_header_branch
      %21 = sbr.rel (%p19) target = $region8
    $region5: #{tpu_custom_call.1} parent=1 // loop_body
      %s23 = ssub.s32 %s18, 1
      %s24 = ssub.s32 %s18, 2
      %s31 = sadd.s32 1, %s26
      %p32 = scmp.ge.s32.totalorder %s31, 1
      %s33 = scalar_select %p32, 0, %s31
      %s34 = sadd.s32 1, %s25
      %s35 = scalar_select %p32, %s34, %s25
      %p36 = scmp.ge.s32.totalorder %s35, 2
      %s37 = scalar_select %p36, 0, %s35
      %s38 = ssub.s32 %s25, %s37
      %s39 = ssub.s32 %s26, %s33
      %s40 = sor.u32 %s38, %s39
      %p41 = scmp.eq.s32.totalorder %s40, 0
      %s43 = sadd.s32 %s42, 1
      %s44 = scalar_select %p41, %s42, %s43
      %p47 = pneg %p41
      %p48 = scmp.eq.s32.totalorder %s18, 1
      %p49 = por %p47, %p48
      %p50 = scmp.ne.s32.totalorder %s42, %s45
      %p51 = scmp.eq.s32.totalorder %s18, 0
      %p52 = por %p50, %p51
      %p53 = scmp.ne.s32.totalorder %s42, %s45
      %p54 = scmp.eq.s32.totalorder %s23, 1
      %p55 = por %p53, %p54
      %p56 = scmp.ne.s32.totalorder %s45, %s46
      %p57 = scmp.eq.s32.totalorder %s23, 0
      %p58 = por %p56, %p57
      %p59 = scmp.ne.s32.totalorder %s45, %s46
      %p60 = scmp.eq.s32.totalorder %s24, 1
      %p61 = por %p59, %p60
      %p63 = scmp.ne.s32.totalorder %s46, %s62
      %p64 = scmp.eq.s32.totalorder %s24, 0
      %p65 = por %p63, %p64
      %s67 = sadd.s32 %s66, 1
      %p70 = scmp.eq.s32.totalorder %s18, 1
      %p71 = scmp.ne.s32.totalorder %s66, %s68
      %p72 = scmp.eq.s32.totalorder %s18, 0
      %p73 = por %p71, %p72
      %p74 = scmp.ne.s32.totalorder %s66, %s68
      %p75 = scmp.eq.s32.totalorder %s23, 1
      %p76 = por %p74, %p75
      %p77 = scmp.ne.s32.totalorder %s68, %s69
      %p78 = scmp.eq.s32.totalorder %s23, 0
      %p79 = por %p77, %p78
      %p80 = scmp.ne.s32.totalorder %s68, %s69
      %p81 = scmp.eq.s32.totalorder %s24, 1
      %p82 = por %p80, %p81
      %p84 = scmp.ne.s32.totalorder %s69, %s83
      %p85 = scmp.eq.s32.totalorder %s24, 0
      %p86 = por %p84, %p85
      %s87 = ssub.s32 %s25, %s37
      %p88 = scmp.eq.s32.totalorder %s87, 0
      %s90 = sadd.s32 %s89, 1
      %s91 = scalar_select %p88, %s89, %s90
      %p94 = pneg %p88
      %p95 = scmp.eq.s32.totalorder %s18, 1
      %p96 = por %p94, %p95
      %p97 = scmp.ne.s32.totalorder %s89, %s92
      %p98 = scmp.eq.s32.totalorder %s18, 0
      %p99 = por %p97, %p98
      %p100 = scmp.ne.s32.totalorder %s89, %s92
      %p101 = scmp.eq.s32.totalorder %s23, 1
      %p102 = por %p100, %p101
      %p103 = scmp.ne.s32.totalorder %s92, %s93
      %p104 = scmp.eq.s32.totalorder %s23, 0
      %p105 = por %p103, %p104
      %p106 = scmp.ne.s32.totalorder %s92, %s93
      %p107 = scmp.eq.s32.totalorder %s24, 1
      %p108 = por %p106, %p107
      %p110 = scmp.ne.s32.totalorder %s93, %s109
      %p111 = scmp.eq.s32.totalorder %s24, 0
      %p112 = por %p110, %p111
      %s114 = sadd.s32 %s113, 1
      %p117 = scmp.eq.s32.totalorder %s18, 1
      %p118 = scmp.ne.s32.totalorder %s113, %s115
      %p119 = scmp.eq.s32.totalorder %s18, 0
      %p120 = por %p118, %p119
      %p121 = scmp.ne.s32.totalorder %s113, %s115
      %p122 = scmp.eq.s32.totalorder %s23, 1
      %p123 = por %p121, %p122
      %p124 = scmp.ne.s32.totalorder %s115, %s116
      %p125 = scmp.eq.s32.totalorder %s23, 0
      %p126 = por %p124, %p125
      %p127 = scmp.ne.s32.totalorder %s115, %s116
      %p128 = scmp.eq.s32.totalorder %s24, 1
      %p129 = por %p127, %p128
      %p131 = scmp.ne.s32.totalorder %s116, %s130
      %p132 = scmp.eq.s32.totalorder %s24, 0
      %p133 = por %p131, %p132
      %s135 = sadd.s32 %s134, 1
      %p138 = scmp.eq.s32.totalorder %s18, 1
      %p139 = scmp.ne.s32.totalorder %s134, %s136
      %p140 = scmp.eq.s32.totalorder %s18, 0
      %p141 = por %p139, %p140
      %p142 = scmp.ne.s32.totalorder %s134, %s136
      %p143 = scmp.eq.s32.totalorder %s23, 1
      %p144 = por %p142, %p143
      %p145 = scmp.ne.s32.totalorder %s136, %s137
      %p146 = scmp.eq.s32.totalorder %s23, 0
      %p147 = por %p145, %p146
      %p148 = scmp.ne.s32.totalorder %s136, %s137
      %p149 = scmp.eq.s32.totalorder %s24, 1
      %p150 = por %p148, %p149
      %p152 = scmp.ne.s32.totalorder %s137, %s151
      %p153 = scmp.eq.s32.totalorder %s24, 0
      %p154 = por %p152, %p153
      %s155 = ssub.s32 %s25, %s37
      %s156 = ssub.s32 %s26, %s33
      %s157 = sor.u32 %s155, %s156
      %p158 = scmp.eq.s32.totalorder %s157, 0
      %s160 = sadd.s32 %s159, 1
      %s161 = scalar_select %p158, %s159, %s160
      %p164 = pneg %p158
      %p165 = scmp.eq.s32.totalorder %s18, 1
      %p166 = por %p164, %p165
      %p167 = scmp.ne.s32.totalorder %s159, %s162
      %p168 = scmp.eq.s32.totalorder %s18, 0
      %p169 = por %p167, %p168
      %p170 = scmp.ne.s32.totalorder %s159, %s162
      %p171 = scmp.eq.s32.totalorder %s23, 1
      %p172 = por %p170, %p171
      %p173 = scmp.ne.s32.totalorder %s162, %s163
      %p174 = scmp.eq.s32.totalorder %s23, 0
      %p175 = por %p173, %p174
      %p176 = scmp.ne.s32.totalorder %s162, %s163
      %p177 = scmp.eq.s32.totalorder %s24, 1
      %p178 = por %p176, %p177
      %p180 = scmp.ne.s32.totalorder %s163, %s179
      %p181 = scmp.eq.s32.totalorder %s24, 0
      %p182 = por %p180, %p181
      %p183 = scmp.le.s32.totalorder 1, %s18
      %p184 = scmp.lt.s32.totalorder %s18, 3
      %p185 = pnand %p183, %p184
      %p186 = pneg %p185
      // Predicated region
      $region9: #{tpu_custom_call.1} parent=5 // pred_check
        _
      $region10: #{tpu_custom_call.1} parent=5 // pred_check_branch
        %188 = sbr.rel (%p185) target = $region12
      $region11: #{tpu_custom_call.1} parent=5 // pred_region
        %s189 = ssub.s32 %s18, 1
        // Predicated region
        $region13: #{tpu_custom_call.1} parent=11 // pred_check
          %p190 = pneg %p79
        $region14: #{tpu_custom_call.1} parent=11 // pred_check_branch
          %192 = sbr.rel (%p190) target = $region16
        $region15: #{tpu_custom_call.1} parent=11 // pred_region
          %s194 = ssub.s32 256, 256
          %195 = vsyncadd [#allocation6], %s194
          %s196 = sshll.u32 [#allocation5], 4
          %s197 = int_to_ptr.vmem [resolvable:$true] %s196
          %202 = dma.hbm_to_vmem [thread:$0]  %s1, 256, %s197, [#allocation6], 128, 128, 8
        $region16: #{tpu_custom_call.1} parent=11 // pred_fallthru
          _
        // Predicated region
        $region17: #{tpu_custom_call.1} parent=11 // pred_check
          %p203 = pneg %p126
        $region18: #{tpu_custom_call.1} parent=11 // pred_check_branch
          %205 = sbr.rel (%p203) target = $region20
        $region19: #{tpu_custom_call.1} parent=11 // pred_region
          %s207 = ssub.s32 2560, 2560
          %208 = vsyncadd [#allocation6], %s207
          %s209 = sshll.u32 [#allocation8], 4
          %s210 = int_to_ptr.vmem [resolvable:$true] %s209
          %215 = dma.hbm_to_vmem [thread:$0]  %s3, 2560, %s210, [#allocation6], 128, 128, 8
        $region20: #{tpu_custom_call.1} parent=11 // pred_fallthru
          _
        // Predicated region
        $region21: #{tpu_custom_call.1} parent=11 // pred_check
          %p216 = pneg %p147
        $region22: #{tpu_custom_call.1} parent=11 // pred_check_branch
          %218 = sbr.rel (%p216) target = $region24
        $region23: #{tpu_custom_call.1} parent=11 // pred_region
          _
        $region24: #{tpu_custom_call.1} parent=11 // pred_fallthru
          _
      $region12: #{tpu_custom_call.1} parent=5 // pred_fallthru
        _
      %p219 = scmp.lt.s32.totalorder %s18, 2
      // Predicated region
      $region25: #{tpu_custom_call.1} parent=5 // pred_check
        %p220 = pneg %p219
      $region26: #{tpu_custom_call.1} parent=5 // pred_check_branch
        %222 = sbr.rel (%p220) target = $region28
      $region27: #{tpu_custom_call.1} parent=5 // pred_region
        // Predicated region
        $region29: #{tpu_custom_call.1} parent=27 // pred_check
          %p223 = pneg %p52
        $region30: #{tpu_custom_call.1} parent=27 // pred_check_branch
          %225 = sbr.rel (%p223) target = $region32
        $region31: #{tpu_custom_call.1} parent=27 // pred_region
          %s226 = sand.u32 %s18, 1
          %s227 = scalar_lea.sflag [#allocation3], %s226
          %s228 = sand.u32 %s42, 1
          %s229 = smul.addr %s228, 16
          %s230 = scalar_lea.vmem [#allocation2], %s229
          %s232 = ssub.s32 256, 256
          %233 = vsyncadd %s227, %s232
          %s234 = smul.addr %s25, 2
          %s235 = sadd.s32 %s26, %s234
          %s236 = smul.addr %s235, 128
          %s237 = scalar_lea.hbm %s0, %s236
          %s238 = sshll.u32 %s230, 4
          %s239 = int_to_ptr.vmem [resolvable:$true] %s238
          %244 = dma.hbm_to_vmem [thread:$0]  %s237, 256, %s239, %s227, 128, 128, 8
        $region32: #{tpu_custom_call.1} parent=27 // pred_fallthru
          _
        // Predicated region
        $region33: #{tpu_custom_call.1} parent=27 // pred_check
          %p245 = pneg %p99
        $region34: #{tpu_custom_call.1} parent=27 // pred_check_branch
          %247 = sbr.rel (%p245) target = $region36
        $region35: #{tpu_custom_call.1} parent=27 // pred_region
          %s248 = sand.u32 %s18, 1
          %s249 = scalar_lea.sflag [#allocation3], %s248
          %s250 = sand.u32 %s89, 1
          %s251 = smul.addr %s250, 16
          %s252 = scalar_lea.vmem [#allocation7], %s251
          %s254 = ssub.s32 256, 256
          %255 = vsyncadd %s249, %s254
          %s256 = smul.addr %s25, 2
          %s257 = smul.addr %s256, 128
          %s258 = scalar_lea.hbm %s2, %s257
          %s259 = sshll.u32 %s252, 4
          %s260 = int_to_ptr.vmem [resolvable:$true] %s259
          %265 = dma.hbm_to_vmem [thread:$0]  %s258, 256, %s260, %s249, 128, 128, 8
        $region36: #{tpu_custom_call.1} parent=27 // pred_fallthru
          _
      $region28: #{tpu_custom_call.1} parent=5 // pred_fallthru
        _
      %p266 = scmp.le.s32.totalorder 1, %s18
      %p267 = scmp.lt.s32.totalorder %s18, 3
      %p268 = pnand %p266, %p267
      %p269 = pneg %p268
      // Predicated region
      $region37: #{tpu_custom_call.1} parent=5 // pred_check
        _
      $region38: #{tpu_custom_call.1} parent=5 // pred_check_branch
        %271 = sbr.rel (%p268) target = $region40
      $region39: #{tpu_custom_call.1} parent=5 // pred_region
        %s272 = ssub.s32 %s18, 1
        %s273 = sand.u32 %s23, 1
        %s274 = scalar_lea.sflag [#allocation3], %s273
        %s275 = sand.u32 %s45, 1
        %s276 = smul.addr %s275, 16
        %s277 = scalar_lea.vmem [#allocation2], %s276
        // Predicated region
        $region41: #{tpu_custom_call.1} parent=39 // pred_check
          %p278 = pneg %p58
        $region42: #{tpu_custom_call.1} parent=39 // pred_check_branch
          %280 = sbr.rel (%p278) target = $region44
        $region43: #{tpu_custom_call.1} parent=39 // pred_region
          %281 = dma.done %s274, 256
        $region44: #{tpu_custom_call.1} parent=39 // pred_fallthru
          _
        // Predicated region
        $region45: #{tpu_custom_call.1} parent=39 // pred_check
          %p282 = pneg %p79
        $region46: #{tpu_custom_call.1} parent=39 // pred_check_branch
          %284 = sbr.rel (%p282) target = $region48
        $region47: #{tpu_custom_call.1} parent=39 // pred_region
          %285 = dma.done [#allocation6], 256
        $region48: #{tpu_custom_call.1} parent=39 // pred_fallthru
          _
        %s286 = sand.u32 %s23, 1
        %s287 = scalar_lea.sflag [#allocation3], %s286
        %s288 = sand.u32 %s92, 1
        %s289 = smul.addr %s288, 16
        %s290 = scalar_lea.vmem [#allocation7], %s289
        // Predicated region
        $region49: #{tpu_custom_call.1} parent=39 // pred_check
          %p291 = pneg %p105
        $region50: #{tpu_custom_call.1} parent=39 // pred_check_branch
          %293 = sbr.rel (%p291) target = $region52
        $region51: #{tpu_custom_call.1} parent=39 // pred_region
          %294 = dma.done %s287, 256
        $region52: #{tpu_custom_call.1} parent=39 // pred_fallthru
          _
        // Predicated region
        $region53: #{tpu_custom_call.1} parent=39 // pred_check
          %p295 = pneg %p126
        $region54: #{tpu_custom_call.1} parent=39 // pred_check_branch
          %297 = sbr.rel (%p295) target = $region56
        $region55: #{tpu_custom_call.1} parent=39 // pred_region
          %298 = dma.done [#allocation6], 2560
        $region56: #{tpu_custom_call.1} parent=39 // pred_fallthru
          _
        %s299 = sand.u32 %s23, 1
        %s300 = scalar_lea.sflag [#allocation3], %s299
        %s301 = sand.u32 %s45, 1
        %s302 = smul.addr %s301, 16
        %s303 = scalar_lea.vmem [#allocation2], %s302
        %p304 = pneg %p58
        %p305 = pneg %p55
        %p306 = pneg %p79
        %p307 = pneg %p76
        %s308 = sand.u32 %s23, 1
        %s309 = scalar_lea.sflag [#allocation3], %s308
        %s310 = sand.u32 %s92, 1
        %s311 = smul.addr %s310, 16
        %s312 = scalar_lea.vmem [#allocation7], %s311
        %p313 = pneg %p105
        %p314 = pneg %p102
        %p315 = pneg %p126
        %p316 = pneg %p123
        %p317 = pneg %p147
        %p318 = pneg %p144
        %p319 = pneg %p175
        %p320 = pneg %p172
        %s321 = sand.u32 %s162, 1
        %s322 = scalar_lea.sflag [#allocation4], %s321
        %s323 = sand.u32 %s162, 1
        %s324 = smul.addr %s323, 16
        %s325 = scalar_lea.vmem [#allocation9], %s324
        %v326 = vld [vmem:[%s277] sm:$0xff]
        %v327 = vld [vmem:[%s277 + $0x8] sm:$0xff]
        %v328 = vld [vmem:[#allocation8] sm:$0xff]
        %v329 = vld [vmem:[#allocation8 + $0x8] sm:$0xff]
        %v330 = vld [vmem:[#allocation8 + $0x10] sm:$0xff]
        %v331 = vld [vmem:[#allocation8 + $0x18] sm:$0xff]
        %v332 = vld [vmem:[#allocation5] sm:$0xff]
        %v333 = vld [vmem:[#allocation5 + $0x8] sm:$0xff]
        %vm334 = vcmask 130048
        %v336 = vsel %vm334, %v332, 0
        %v339 = vsel %vm334, %v333, 0
        %341 = vmatprep.subr.mxu0 0.0
        %342 = vmatpush1.msra.mxu0 0.0
        %343 = vmatprep.subr.mxu0 0.0
        %344 = vmatpush1.msra.mxu0 0.0
        %345 = vmatprep.subr.mxu0 0.0
        %346 = vmatpush1.msra.mxu0 0.0
        %347 = vmatprep.subr.mxu0 0.0
        %348 = vmatpush1.msra.mxu0 0.0
        %349 = vmatprep.subr.mxu0 0.0
        %350 = vmatpush1.msra.mxu0 0.0
        %351 = vmatprep.subr.mxu0 0.0
        %352 = vmatpush1.msra.mxu0 0.0
        %353 = vmatprep.subr.mxu0 0.0
        %354 = vmatpush1.msra.mxu0 0.0
        %355 = vmatprep.subr.mxu0 0.0
        %356 = vmatpush1.msra.mxu0 0.0
        %357 = vmatprep.subr.mxu0 0.0
        %358 = vmatpush1.msra.mxu0 0.0
        %359 = vmatprep.subr.mxu0 0.0
        %360 = vmatpush1.msra.mxu0 0.0
        %361 = vmatprep.subr.mxu0 0.0
        %362 = vmatpush1.msra.mxu0 0.0
        %363 = vmatprep.subr.mxu0 0.0
        %364 = vmatpush1.msra.mxu0 0.0
        %365 = vmatprep.subr.mxu0 0.0
        %366 = vmatpush1.msra.mxu0 0.0
        %367 = vmatprep.subr.mxu0 0.0
        %368 = vmatpush1.msra.mxu0 0.0
        %369 = vmatprep.subr.mxu0 0.0
        %370 = vmatpush1.msra.mxu0 %v327
        %371 = vmatprep.subr.mxu0 0.0
        %372 = vmatpush1.msra.mxu0 %v326
        %373 = vmatprep.subr.mxu0 0.0
        %374 = vmatpush2.msra.mxu0 0.0
        %375 = vmatprep.subr.mxu0 0.0
        %376 = vmatpush2.msra.mxu0 0.0
        %377 = vmatprep.subr.mxu0 0.0
        %378 = vmatpush2.msra.mxu0 0.0
        %379 = vmatprep.subr.mxu0 0.0
        %380 = vmatpush2.msra.mxu0 0.0
        %381 = vmatprep.subr.mxu0 0.0
        %382 = vmatpush2.msra.mxu0 0.0
        %383 = vmatprep.subr.mxu0 0.0
        %384 = vmatpush2.msra.mxu0 0.0
        %385 = vmatprep.subr.mxu0 0.0
        %386 = vmatpush2.msra.mxu0 0.0
        %387 = vmatprep.subr.mxu0 0.0
        %388 = vmatpush2.msra.mxu0 0.0
        %389 = vmatprep.subr.mxu0 0.0
        %390 = vmatpush2.msra.mxu0 0.0
        %391 = vmatprep.subr.mxu0 0.0
        %392 = vmatpush2.msra.mxu0 0.0
        %393 = vmatprep.subr.mxu0 0.0
        %394 = vmatpush2.msra.mxu0 0.0
        %395 = vmatprep.subr.mxu0 0.0
        %396 = vmatpush2.msra.mxu0 0.0
        %397 = vmatprep.subr.mxu0 0.0
        %398 = vmatpush2.msra.mxu0 0.0
        %399 = vmatprep.subr.mxu0 0.0
        %400 = vmatpush2.msra.mxu0 0.0
        %401 = vmatprep.subr.mxu0 0.0
        %402 = vmatpush2.msra.mxu0 0.0
        %403 = vmatprep.subr.mxu0 0.0
        %404 = vmatpush2.msra.mxu0 0.0
        %405 = vmatprep.mubr.f32.mxu0 0.0
        %406 = vmatmul.mubr.f32.gmra.mxu0 %v336
        %v407 = vpop.f32.mrf.mxu0
        %v408 = vadd.f32 0.0, %v407
        %v409 = vpop.f32.mrf.mxu0
        %410 = vmatprep.mubr.f32.mxu0 0.0
        %411 = vmatmul.mubr.f32.gmra.mxu0 %v339
        %v412 = vpop.f32.mrf.mxu0
        %v413 = vadd.f32 0.0, %v412
        %v414 = vpop.f32.mrf.mxu0
        %415 = vdwg.mxu0
        %s416 = scalar_lea.vmem [#allocation8], 32
        %v417 = vld [vmem:[%s416] sm:$0xff]
        %v418 = vld [vmem:[%s416 + $0x8] sm:$0xff]
        %v419 = vld [vmem:[%s416 + $0x10] sm:$0xff]
        %v420 = vld [vmem:[%s416 + $0x18] sm:$0xff]
        %vm421 = vcmask 261120
        %v423 = vsel %vm421, %v408, 0
        %v426 = vsel %vm421, %v413, 0
        %428 = vmatprep.subr.mxu0 0.0
        %429 = vmatpush1.msra.mxu0 0.0
        %430 = vmatprep.subr.mxu0 0.0
        %431 = vmatpush1.msra.mxu0 0.0
        %432 = vmatprep.subr.mxu0 0.0
        %433 = vmatpush1.msra.mxu0 0.0
        %434 = vmatprep.subr.mxu0 0.0
        %435 = vmatpush1.msra.mxu0 0.0
        %436 = vmatprep.subr.mxu0 0.0
        %437 = vmatpush1.msra.mxu0 0.0
        %438 = vmatprep.subr.mxu0 0.0
        %439 = vmatpush1.msra.mxu0 0.0
        %440 = vmatprep.subr.mxu0 0.0
        %441 = vmatpush1.msra.mxu0 0.0
        %442 = vmatprep.subr.mxu0 0.0
        %443 = vmatpush1.msra.mxu0 0.0
        %444 = vmatprep.subr.mxu0 0.0
        %445 = vmatpush1.msra.mxu0 0.0
        %446 = vmatprep.subr.mxu0 0.0
        %447 = vmatpush1.msra.mxu0 0.0
        %448 = vmatprep.subr.mxu0 0.0
        %449 = vmatpush1.msra.mxu0 0.0
        %450 = vmatprep.subr.mxu0 0.0
        %451 = vmatpush1.msra.mxu0 0.0
        %452 = vmatprep.subr.mxu0 0.0
        %453 = vmatpush1.msra.mxu0 %v420
        %454 = vmatprep.subr.mxu0 0.0
        %455 = vmatpush1.msra.mxu0 %v419
        %456 = vmatprep.subr.mxu0 0.0
        %457 = vmatpush1.msra.mxu0 %v418
        %458 = vmatprep.subr.mxu0 0.0
        %459 = vmatpush1.msra.mxu0 %v417
        %460 = vmatprep.subr.mxu0 0.0
        %461 = vmatpush2.msra.mxu0 0.0
        %462 = vmatprep.subr.mxu0 0.0
        %463 = vmatpush2.msra.mxu0 0.0
        %464 = vmatprep.subr.mxu0 0.0
        %465 = vmatpush2.msra.mxu0 0.0
        %466 = vmatprep.subr.mxu0 0.0
        %467 = vmatpush2.msra.mxu0 0.0
        %468 = vmatprep.subr.mxu0 0.0
        %469 = vmatpush2.msra.mxu0 0.0
        %470 = vmatprep.subr.mxu0 0.0
        %471 = vmatpush2.msra.mxu0 0.0
        %472 = vmatprep.subr.mxu0 0.0
        %473 = vmatpush2.msra.mxu0 0.0
        %474 = vmatprep.subr.mxu0 0.0
        %475 = vmatpush2.msra.mxu0 0.0
        %476 = vmatprep.subr.mxu0 0.0
        %477 = vmatpush2.msra.mxu0 0.0
        %478 = vmatprep.subr.mxu0 0.0
        %479 = vmatpush2.msra.mxu0 0.0
        %480 = vmatprep.subr.mxu0 0.0
        %481 = vmatpush2.msra.mxu0 0.0
        %482 = vmatprep.subr.mxu0 0.0
        %483 = vmatpush2.msra.mxu0 0.0
        %484 = vmatprep.subr.mxu0 0.0
        %485 = vmatpush2.msra.mxu0 0.0
        %486 = vmatprep.subr.mxu0 0.0
        %487 = vmatpush2.msra.mxu0 0.0
        %488 = vmatprep.subr.mxu0 0.0
        %489 = vmatpush2.msra.mxu0 0.0
        %490 = vmatprep.subr.mxu0 0.0
        %491 = vmatpush2.msra.mxu0 0.0
        %492 = vmatprep.mubr.f32.mxu0 0.0
        %493 = vmatmul.mubr.f32.gmra.mxu0 %v423
        %v494 = vpop.f32.mrf.mxu0
        %v495 = vadd.f32 0.0, %v494
        %v496 = vpop.f32.mrf.mxu0
        %497 = vmatprep.mubr.f32.mxu0 0.0
        %498 = vmatmul.mubr.f32.gmra.mxu0 %v426
        %v499 = vpop.f32.mrf.mxu0
        %v500 = vadd.f32 0.0, %v499
        %v501 = vpop.f32.mrf.mxu0
        %502 = vdwg.mxu0
        %v504 = vsel %vm421, %v326, 0
        %v507 = vsel %vm421, %v327, 0
        %509 = vmatprep.subr.mxu0 0.0
        %510 = vmatpush1.msra.mxu0 0.0
        %511 = vmatprep.subr.mxu0 0.0
        %512 = vmatpush1.msra.mxu0 0.0
        %513 = vmatprep.subr.mxu0 0.0
        %514 = vmatpush1.msra.mxu0 0.0
        %515 = vmatprep.subr.mxu0 0.0
        %516 = vmatpush1.msra.mxu0 0.0
        %517 = vmatprep.subr.mxu0 0.0
        %518 = vmatpush1.msra.mxu0 0.0
        %519 = vmatprep.subr.mxu0 0.0
        %520 = vmatpush1.msra.mxu0 0.0
        %521 = vmatprep.subr.mxu0 0.0
        %522 = vmatpush1.msra.mxu0 0.0
        %523 = vmatprep.subr.mxu0 0.0
        %524 = vmatpush1.msra.mxu0 0.0
        %525 = vmatprep.subr.mxu0 0.0
        %526 = vmatpush1.msra.mxu0 0.0
        %527 = vmatprep.subr.mxu0 0.0
        %528 = vmatpush1.msra.mxu0 0.0
        %529 = vmatprep.subr.mxu0 0.0
        %530 = vmatpush1.msra.mxu0 0.0
        %531 = vmatprep.subr.mxu0 0.0
        %532 = vmatpush1.msra.mxu0 0.0
        %533 = vmatprep.subr.mxu0 0.0
        %534 = vmatpush1.msra.mxu0 %v331
        %535 = vmatprep.subr.mxu0 0.0
        %536 = vmatpush1.msra.mxu0 %v330
        %537 = vmatprep.subr.mxu0 0.0
        %538 = vmatpush1.msra.mxu0 %v329
        %539 = vmatprep.subr.mxu0 0.0
        %540 = vmatpush1.msra.mxu0 %v328
        %541 = vmatprep.subr.mxu0 0.0
        %542 = vmatpush2.msra.mxu0 0.0
        %543 = vmatprep.subr.mxu0 0.0
        %544 = vmatpush2.msra.mxu0 0.0
        %545 = vmatprep.subr.mxu0 0.0
        %546 = vmatpush2.msra.mxu0 0.0
        %547 = vmatprep.subr.mxu0 0.0
        %548 = vmatpush2.msra.mxu0 0.0
        %549 = vmatprep.subr.mxu0 0.0
        %550 = vmatpush2.msra.mxu0 0.0
        %551 = vmatprep.subr.mxu0 0.0
        %552 = vmatpush2.msra.mxu0 0.0
        %553 = vmatprep.subr.mxu0 0.0
        %554 = vmatpush2.msra.mxu0 0.0
        %555 = vmatprep.subr.mxu0 0.0
        %556 = vmatpush2.msra.mxu0 0.0
        %557 = vmatprep.subr.mxu0 0.0
        %558 = vmatpush2.msra.mxu0 0.0
        %559 = vmatprep.subr.mxu0 0.0
        %560 = vmatpush2.msra.mxu0 0.0
        %561 = vmatprep.subr.mxu0 0.0
        %562 = vmatpush2.msra.mxu0 0.0
        %563 = vmatprep.subr.mxu0 0.0
        %564 = vmatpush2.msra.mxu0 0.0
        %565 = vmatprep.subr.mxu0 0.0
        %566 = vmatpush2.msra.mxu0 0.0
        %567 = vmatprep.subr.mxu0 0.0
        %568 = vmatpush2.msra.mxu0 0.0
        %569 = vmatprep.subr.mxu0 0.0
        %570 = vmatpush2.msra.mxu0 0.0
        %571 = vmatprep.subr.mxu0 0.0
        %572 = vmatpush2.msra.mxu0 0.0
        %573 = vmatprep.mubr.f32.mxu0 0.0
        %574 = vmatmul.mubr.f32.gmra.mxu0 %v504
        %v575 = vpop.f32.mrf.mxu0
        %v576 = vadd.f32 %v495, %v575
        %v577 = vpop.f32.mrf.mxu0
        %578 = vmatprep.mubr.f32.mxu0 0.0
        %579 = vmatmul.mubr.f32.gmra.mxu0 %v507
        %v580 = vpop.f32.mrf.mxu0
        %v581 = vadd.f32 %v500, %v580
        %v582 = vpop.f32.mrf.mxu0
        %583 = vdwg.mxu0
        %584 = vmatprep.subr.mxu0 0.0
        %585 = vmatpush1.msra.mxu0 0.0
        %586 = vmatprep.subr.mxu0 0.0
        %587 = vmatpush1.msra.mxu0 0.0
        %588 = vmatprep.subr.mxu0 0.0
        %589 = vmatpush1.msra.mxu0 0.0
        %590 = vmatprep.subr.mxu0 0.0
        %591 = vmatpush1.msra.mxu0 0.0
        %592 = vmatprep.subr.mxu0 0.0
        %593 = vmatpush1.msra.mxu0 0.0
        %594 = vmatprep.subr.mxu0 0.0
        %595 = vmatpush1.msra.mxu0 0.0
        %596 = vmatprep.subr.mxu0 0.0
        %597 = vmatpush1.msra.mxu0 0.0
        %598 = vmatprep.subr.mxu0 0.0
        %599 = vmatpush1.msra.mxu0 0.0
        %600 = vmatprep.subr.mxu0 0.0
        %601 = vmatpush1.msra.mxu0 0.0
        %602 = vmatprep.subr.mxu0 0.0
        %603 = vmatpush1.msra.mxu0 0.0
        %604 = vmatprep.subr.mxu0 0.0
        %605 = vmatpush1.msra.mxu0 0.0
        %606 = vmatprep.subr.mxu0 0.0
        %607 = vmatpush1.msra.mxu0 0.0
        %608 = vmatprep.subr.mxu0 0.0
        %609 = vmatpush1.msra.mxu0 0.0
        %610 = vmatprep.subr.mxu0 0.0
        %611 = vmatpush1.msra.mxu0 0.0
        %612 = vmatprep.subr.mxu0 0.0
        %613 = vmatpush1.msra.mxu0 %v413
        %614 = vmatprep.subr.mxu0 0.0
        %615 = vmatpush1.msra.mxu0 %v408
        %616 = vmatprep.subr.mxu0 0.0
        %617 = vmatpush2.msra.mxu0 0.0
        %618 = vmatprep.subr.mxu0 0.0
        %619 = vmatpush2.msra.mxu0 0.0
        %620 = vmatprep.subr.mxu0 0.0
        %621 = vmatpush2.msra.mxu0 0.0
        %622 = vmatprep.subr.mxu0 0.0
        %623 = vmatpush2.msra.mxu0 0.0
        %624 = vmatprep.subr.mxu0 0.0
        %625 = vmatpush2.msra.mxu0 0.0
        %626 = vmatprep.subr.mxu0 0.0
        %627 = vmatpush2.msra.mxu0 0.0
        %628 = vmatprep.subr.mxu0 0.0
        %629 = vmatpush2.msra.mxu0 0.0
        %630 = vmatprep.subr.mxu0 0.0
        %631 = vmatpush2.msra.mxu0 0.0
        %632 = vmatprep.subr.mxu0 0.0
        %633 = vmatpush2.msra.mxu0 0.0
        %634 = vmatprep.subr.mxu0 0.0
        %635 = vmatpush2.msra.mxu0 0.0
        %636 = vmatprep.subr.mxu0 0.0
        %637 = vmatpush2.msra.mxu0 0.0
        %638 = vmatprep.subr.mxu0 0.0
        %639 = vmatpush2.msra.mxu0 0.0
        %640 = vmatprep.subr.mxu0 0.0
        %641 = vmatpush2.msra.mxu0 0.0
        %642 = vmatprep.subr.mxu0 0.0
        %643 = vmatpush2.msra.mxu0 0.0
        %644 = vmatprep.subr.mxu0 0.0
        %645 = vmatpush2.msra.mxu0 0.0
        %646 = vmatprep.subr.mxu0 0.0
        %647 = vmatpush2.msra.mxu0 0.0
        %648 = vmatprep.mubr.f32.mxu0 0.0
        %649 = vmatmul.mubr.f32.gmra.mxu0 %v336
        %v650 = vpop.f32.mrf.mxu0
        %v651 = vadd.f32 0.0, %v650
        %v652 = vpop.f32.mrf.mxu0
        %653 = vmatprep.mubr.f32.mxu0 0.0
        %654 = vmatmul.mubr.f32.gmra.mxu0 %v339
        %v655 = vpop.f32.mrf.mxu0
        %v656 = vadd.f32 0.0, %v655
        %v657 = vpop.f32.mrf.mxu0
        %658 = vdwg.mxu0
        %s659 = scalar_lea.vmem [#allocation8], 64
        %v660 = vld [vmem:[%s659] sm:$0xff]
        %v661 = vld [vmem:[%s659 + $0x8] sm:$0xff]
        %v662 = vld [vmem:[%s659 + $0x10] sm:$0xff]
        %v663 = vld [vmem:[%s659 + $0x18] sm:$0xff]
        %v665 = vsel %vm421, %v651, 0
        %v668 = vsel %vm421, %v656, 0
        %670 = vmatprep.subr.mxu0 0.0
        %671 = vmatpush1.msra.mxu0 0.0
        %672 = vmatprep.subr.mxu0 0.0
        %673 = vmatpush1.msra.mxu0 0.0
        %674 = vmatprep.subr.mxu0 0.0
        %675 = vmatpush1.msra.mxu0 0.0
        %676 = vmatprep.subr.mxu0 0.0
        %677 = vmatpush1.msra.mxu0 0.0
        %678 = vmatprep.subr.mxu0 0.0
        %679 = vmatpush1.msra.mxu0 0.0
        %680 = vmatprep.subr.mxu0 0.0
        %681 = vmatpush1.msra.mxu0 0.0
        %682 = vmatprep.subr.mxu0 0.0
        %683 = vmatpush1.msra.mxu0 0.0
        %684 = vmatprep.subr.mxu0 0.0
        %685 = vmatpush1.msra.mxu0 0.0
        %686 = vmatprep.subr.mxu0 0.0
        %687 = vmatpush1.msra.mxu0 0.0
        %688 = vmatprep.subr.mxu0 0.0
        %689 = vmatpush1.msra.mxu0 0.0
        %690 = vmatprep.subr.mxu0 0.0
        %691 = vmatpush1.msra.mxu0 0.0
        %692 = vmatprep.subr.mxu0 0.0
        %693 = vmatpush1.msra.mxu0 0.0
        %694 = vmatprep.subr.mxu0 0.0
        %695 = vmatpush1.msra.mxu0 %v663
        %696 = vmatprep.subr.mxu0 0.0
        %697 = vmatpush1.msra.mxu0 %v662
        %698 = vmatprep.subr.mxu0 0.0
        %699 = vmatpush1.msra.mxu0 %v661
        %700 = vmatprep.subr.mxu0 0.0
        %701 = vmatpush1.msra.mxu0 %v660
        %702 = vmatprep.subr.mxu0 0.0
        %703 = vmatpush2.msra.mxu0 0.0
        %704 = vmatprep.subr.mxu0 0.0
        %705 = vmatpush2.msra.mxu0 0.0
        %706 = vmatprep.subr.mxu0 0.0
        %707 = vmatpush2.msra.mxu0 0.0
        %708 = vmatprep.subr.mxu0 0.0
        %709 = vmatpush2.msra.mxu0 0.0
        %710 = vmatprep.subr.mxu0 0.0
        %711 = vmatpush2.msra.mxu0 0.0
        %712 = vmatprep.subr.mxu0 0.0
        %713 = vmatpush2.msra.mxu0 0.0
        %714 = vmatprep.subr.mxu0 0.0
        %715 = vmatpush2.msra.mxu0 0.0
        %716 = vmatprep.subr.mxu0 0.0
        %717 = vmatpush2.msra.mxu0 0.0
        %718 = vmatprep.subr.mxu0 0.0
        %719 = vmatpush2.msra.mxu0 0.0
        %720 = vmatprep.subr.mxu0 0.0
        %721 = vmatpush2.msra.mxu0 0.0
        %722 = vmatprep.subr.mxu0 0.0
        %723 = vmatpush2.msra.mxu0 0.0
        %724 = vmatprep.subr.mxu0 0.0
        %725 = vmatpush2.msra.mxu0 0.0
        %726 = vmatprep.subr.mxu0 0.0
        %727 = vmatpush2.msra.mxu0 0.0
        %728 = vmatprep.subr.mxu0 0.0
        %729 = vmatpush2.msra.mxu0 0.0
        %730 = vmatprep.subr.mxu0 0.0
        %731 = vmatpush2.msra.mxu0 0.0
        %732 = vmatprep.subr.mxu0 0.0
        %733 = vmatpush2.msra.mxu0 0.0
        %734 = vmatprep.mubr.f32.mxu0 0.0
        %735 = vmatmul.mubr.f32.gmra.mxu0 %v665
        %v736 = vpop.f32.mrf.mxu0
        %v737 = vadd.f32 0.0, %v736
        %v738 = vpop.f32.mrf.mxu0
        %739 = vmatprep.mubr.f32.mxu0 0.0
        %740 = vmatmul.mubr.f32.gmra.mxu0 %v668
        %v741 = vpop.f32.mrf.mxu0
        %v742 = vadd.f32 0.0, %v741
        %v743 = vpop.f32.mrf.mxu0
        %744 = vdwg.mxu0
        %v745 = vadd.f32 %v576, %v737
        %v746 = vadd.f32 %v581, %v742
        %v747 = vld [vmem:[%s290] sm:$0xff]
        %v748 = vld [vmem:[%s290 + $0x8] sm:$0xff]
        %v750 = vsel %vm334, %v747, 0
        %v753 = vsel %vm334, %v748, 0
        %755 = vmatprep.subr.mxu0 0.0
        %756 = vmatpush1.msra.mxu0 0.0
        %757 = vmatprep.subr.mxu0 0.0
        %758 = vmatpush1.msra.mxu0 0.0
        %759 = vmatprep.subr.mxu0 0.0
        %760 = vmatpush1.msra.mxu0 0.0
        %761 = vmatprep.subr.mxu0 0.0
        %762 = vmatpush1.msra.mxu0 0.0
        %763 = vmatprep.subr.mxu0 0.0
        %764 = vmatpush1.msra.mxu0 0.0
        %765 = vmatprep.subr.mxu0 0.0
        %766 = vmatpush1.msra.mxu0 0.0
        %767 = vmatprep.subr.mxu0 0.0
        %768 = vmatpush1.msra.mxu0 0.0
        %769 = vmatprep.subr.mxu0 0.0
        %770 = vmatpush1.msra.mxu0 0.0
        %771 = vmatprep.subr.mxu0 0.0
        %772 = vmatpush1.msra.mxu0 0.0
        %773 = vmatprep.subr.mxu0 0.0
        %774 = vmatpush1.msra.mxu0 0.0
        %775 = vmatprep.subr.mxu0 0.0
        %776 = vmatpush1.msra.mxu0 0.0
        %777 = vmatprep.subr.mxu0 0.0
        %778 = vmatpush1.msra.mxu0 0.0
        %779 = vmatprep.subr.mxu0 0.0
        %780 = vmatpush1.msra.mxu0 0.0
        %781 = vmatprep.subr.mxu0 0.0
        %782 = vmatpush1.msra.mxu0 0.0
        %783 = vmatprep.subr.mxu0 0.0
        %784 = vmatpush1.msra.mxu0 %v327
        %785 = vmatprep.subr.mxu0 0.0
        %786 = vmatpush1.msra.mxu0 %v326
        %787 = vmatprep.subr.mxu0 0.0
        %788 = vmatpush2.msra.mxu0 0.0
        %789 = vmatprep.subr.mxu0 0.0
        %790 = vmatpush2.msra.mxu0 0.0
        %791 = vmatprep.subr.mxu0 0.0
        %792 = vmatpush2.msra.mxu0 0.0
        %793 = vmatprep.subr.mxu0 0.0
        %794 = vmatpush2.msra.mxu0 0.0
        %795 = vmatprep.subr.mxu0 0.0
        %796 = vmatpush2.msra.mxu0 0.0
        %797 = vmatprep.subr.mxu0 0.0
        %798 = vmatpush2.msra.mxu0 0.0
        %799 = vmatprep.subr.mxu0 0.0
        %800 = vmatpush2.msra.mxu0 0.0
        %801 = vmatprep.subr.mxu0 0.0
        %802 = vmatpush2.msra.mxu0 0.0
        %803 = vmatprep.subr.mxu0 0.0
        %804 = vmatpush2.msra.mxu0 0.0
        %805 = vmatprep.subr.mxu0 0.0
        %806 = vmatpush2.msra.mxu0 0.0
        %807 = vmatprep.subr.mxu0 0.0
        %808 = vmatpush2.msra.mxu0 0.0
        %809 = vmatprep.subr.mxu0 0.0
        %810 = vmatpush2.msra.mxu0 0.0
        %811 = vmatprep.subr.mxu0 0.0
        %812 = vmatpush2.msra.mxu0 0.0
        %813 = vmatprep.subr.mxu0 0.0
        %814 = vmatpush2.msra.mxu0 0.0
        %815 = vmatprep.subr.mxu0 0.0
        %816 = vmatpush2.msra.mxu0 0.0
        %817 = vmatprep.subr.mxu0 0.0
        %818 = vmatpush2.msra.mxu0 0.0
        %819 = vmatprep.mubr.f32.mxu0 0.0
        %820 = vmatmul.mubr.f32.gmra.mxu0 %v750
        %v821 = vpop.f32.mrf.mxu0
        %v822 = vadd.f32 0.0, %v821
        %v823 = vpop.f32.mrf.mxu0
        %824 = vmatprep.mubr.f32.mxu0 0.0
        %825 = vmatmul.mubr.f32.gmra.mxu0 %v753
        %v826 = vpop.f32.mrf.mxu0
        %v827 = vadd.f32 0.0, %v826
        %v828 = vpop.f32.mrf.mxu0
        %829 = vdwg.mxu0
        %s830 = scalar_lea.vmem [#allocation8], 96
        %v831 = vld [vmem:[%s830] sm:$0xff]
        %v832 = vld [vmem:[%s830 + $0x8] sm:$0xff]
        %v833 = vld [vmem:[%s830 + $0x10] sm:$0xff]
        %v834 = vld [vmem:[%s830 + $0x18] sm:$0xff]
        %v836 = vsel %vm421, %v822, 0
        %v839 = vsel %vm421, %v827, 0
        %841 = vmatprep.subr.mxu0 0.0
        %842 = vmatpush1.msra.mxu0 0.0
        %843 = vmatprep.subr.mxu0 0.0
        %844 = vmatpush1.msra.mxu0 0.0
        %845 = vmatprep.subr.mxu0 0.0
        %846 = vmatpush1.msra.mxu0 0.0
        %847 = vmatprep.subr.mxu0 0.0
        %848 = vmatpush1.msra.mxu0 0.0
        %849 = vmatprep.subr.mxu0 0.0
        %850 = vmatpush1.msra.mxu0 0.0
        %851 = vmatprep.subr.mxu0 0.0
        %852 = vmatpush1.msra.mxu0 0.0
        %853 = vmatprep.subr.mxu0 0.0
        %854 = vmatpush1.msra.mxu0 0.0
        %855 = vmatprep.subr.mxu0 0.0
        %856 = vmatpush1.msra.mxu0 0.0
        %857 = vmatprep.subr.mxu0 0.0
        %858 = vmatpush1.msra.mxu0 0.0
        %859 = vmatprep.subr.mxu0 0.0
        %860 = vmatpush1.msra.mxu0 0.0
        %861 = vmatprep.subr.mxu0 0.0
        %862 = vmatpush1.msra.mxu0 0.0
        %863 = vmatprep.subr.mxu0 0.0
        %864 = vmatpush1.msra.mxu0 0.0
        %865 = vmatprep.subr.mxu0 0.0
        %866 = vmatpush1.msra.mxu0 %v834
        %867 = vmatprep.subr.mxu0 0.0
        %868 = vmatpush1.msra.mxu0 %v833
        %869 = vmatprep.subr.mxu0 0.0
        %870 = vmatpush1.msra.mxu0 %v832
        %871 = vmatprep.subr.mxu0 0.0
        %872 = vmatpush1.msra.mxu0 %v831
        %873 = vmatprep.subr.mxu0 0.0
        %874 = vmatpush2.msra.mxu0 0.0
        %875 = vmatprep.subr.mxu0 0.0
        %876 = vmatpush2.msra.mxu0 0.0
        %877 = vmatprep.subr.mxu0 0.0
        %878 = vmatpush2.msra.mxu0 0.0
        %879 = vmatprep.subr.mxu0 0.0
        %880 = vmatpush2.msra.mxu0 0.0
        %881 = vmatprep.subr.mxu0 0.0
        %882 = vmatpush2.msra.mxu0 0.0
        %883 = vmatprep.subr.mxu0 0.0
        %884 = vmatpush2.msra.mxu0 0.0
        %885 = vmatprep.subr.mxu0 0.0
        %886 = vmatpush2.msra.mxu0 0.0
        %887 = vmatprep.subr.mxu0 0.0
        %888 = vmatpush2.msra.mxu0 0.0
        %889 = vmatprep.subr.mxu0 0.0
        %890 = vmatpush2.msra.mxu0 0.0
        %891 = vmatprep.subr.mxu0 0.0
        %892 = vmatpush2.msra.mxu0 0.0
        %893 = vmatprep.subr.mxu0 0.0
        %894 = vmatpush2.msra.mxu0 0.0
        %895 = vmatprep.subr.mxu0 0.0
        %896 = vmatpush2.msra.mxu0 0.0
        %897 = vmatprep.subr.mxu0 0.0
        %898 = vmatpush2.msra.mxu0 0.0
        %899 = vmatprep.subr.mxu0 0.0
        %900 = vmatpush2.msra.mxu0 0.0
        %901 = vmatprep.subr.mxu0 0.0
        %902 = vmatpush2.msra.mxu0 0.0
        %903 = vmatprep.subr.mxu0 0.0
        %904 = vmatpush2.msra.mxu0 0.0
        %905 = vmatprep.mubr.f32.mxu0 0.0
        %906 = vmatmul.mubr.f32.gmra.mxu0 %v836
        %v907 = vpop.f32.mrf.mxu0
        %v908 = vadd.f32 0.0, %v907
        %v909 = vpop.f32.mrf.mxu0
        %910 = vmatprep.mubr.f32.mxu0 0.0
        %911 = vmatmul.mubr.f32.gmra.mxu0 %v839
        %v912 = vpop.f32.mrf.mxu0
        %v913 = vadd.f32 0.0, %v912
        %v914 = vpop.f32.mrf.mxu0
        %915 = vdwg.mxu0
        %v916 = vadd.f32 %v745, %v908
        %v917 = vadd.f32 %v746, %v913
        %918 = vmatprep.subr.mxu0 0.0
        %919 = vmatpush1.msra.mxu0 0.0
        %920 = vmatprep.subr.mxu0 0.0
        %921 = vmatpush1.msra.mxu0 0.0
        %922 = vmatprep.subr.mxu0 0.0
        %923 = vmatpush1.msra.mxu0 0.0
        %924 = vmatprep.subr.mxu0 0.0
        %925 = vmatpush1.msra.mxu0 0.0
        %926 = vmatprep.subr.mxu0 0.0
        %927 = vmatpush1.msra.mxu0 0.0
        %928 = vmatprep.subr.mxu0 0.0
        %929 = vmatpush1.msra.mxu0 0.0
        %930 = vmatprep.subr.mxu0 0.0
        %931 = vmatpush1.msra.mxu0 0.0
        %932 = vmatprep.subr.mxu0 0.0
        %933 = vmatpush1.msra.mxu0 0.0
        %934 = vmatprep.subr.mxu0 0.0
        %935 = vmatpush1.msra.mxu0 0.0
        %936 = vmatprep.subr.mxu0 0.0
        %937 = vmatpush1.msra.mxu0 0.0
        %938 = vmatprep.subr.mxu0 0.0
        %939 = vmatpush1.msra.mxu0 0.0
        %940 = vmatprep.subr.mxu0 0.0
        %941 = vmatpush1.msra.mxu0 0.0
        %942 = vmatprep.subr.mxu0 0.0
        %943 = vmatpush1.msra.mxu0 0.0
        %944 = vmatprep.subr.mxu0 0.0
        %945 = vmatpush1.msra.mxu0 0.0
        %946 = vmatprep.subr.mxu0 0.0
        %947 = vmatpush1.msra.mxu0 %v827
        %948 = vmatprep.subr.mxu0 0.0
        %949 = vmatpush1.msra.mxu0 %v822
        %950 = vmatprep.subr.mxu0 0.0
        %951 = vmatpush2.msra.mxu0 0.0
        %952 = vmatprep.subr.mxu0 0.0
        %953 = vmatpush2.msra.mxu0 0.0
        %954 = vmatprep.subr.mxu0 0.0
        %955 = vmatpush2.msra.mxu0 0.0
        %956 = vmatprep.subr.mxu0 0.0
        %957 = vmatpush2.msra.mxu0 0.0
        %958 = vmatprep.subr.mxu0 0.0
        %959 = vmatpush2.msra.mxu0 0.0
        %960 = vmatprep.subr.mxu0 0.0
        %961 = vmatpush2.msra.mxu0 0.0
        %962 = vmatprep.subr.mxu0 0.0
        %963 = vmatpush2.msra.mxu0 0.0
        %964 = vmatprep.subr.mxu0 0.0
        %965 = vmatpush2.msra.mxu0 0.0
        %966 = vmatprep.subr.mxu0 0.0
        %967 = vmatpush2.msra.mxu0 0.0
        %968 = vmatprep.subr.mxu0 0.0
        %969 = vmatpush2.msra.mxu0 0.0
        %970 = vmatprep.subr.mxu0 0.0
        %971 = vmatpush2.msra.mxu0 0.0
        %972 = vmatprep.subr.mxu0 0.0
        %973 = vmatpush2.msra.mxu0 0.0
        %974 = vmatprep.subr.mxu0 0.0
        %975 = vmatpush2.msra.mxu0 0.0
        %976 = vmatprep.subr.mxu0 0.0
        %977 = vmatpush2.msra.mxu0 0.0
        %978 = vmatprep.subr.mxu0 0.0
        %979 = vmatpush2.msra.mxu0 0.0
        %980 = vmatprep.subr.mxu0 0.0
        %981 = vmatpush2.msra.mxu0 0.0
        %982 = vmatprep.mubr.f32.mxu0 0.0
        %983 = vmatmul.mubr.f32.gmra.mxu0 %v750
        %v984 = vpop.f32.mrf.mxu0
        %v985 = vadd.f32 0.0, %v984
        %v986 = vpop.f32.mrf.mxu0
        %987 = vmatprep.mubr.f32.mxu0 0.0
        %988 = vmatmul.mubr.f32.gmra.mxu0 %v753
        %v989 = vpop.f32.mrf.mxu0
        %v990 = vadd.f32 0.0, %v989
        %v991 = vpop.f32.mrf.mxu0
        %992 = vdwg.mxu0
        %s993 = scalar_lea.vmem [#allocation8], 128
        %v994 = vld [vmem:[%s993] sm:$0xff]
        %v995 = vld [vmem:[%s993 + $0x8] sm:$0xff]
        %v996 = vld [vmem:[%s993 + $0x10] sm:$0xff]
        %v997 = vld [vmem:[%s993 + $0x18] sm:$0xff]
        %v999 = vsel %vm421, %v985, 0
        %v1002 = vsel %vm421, %v990, 0
        %1004 = vmatprep.subr.mxu0 0.0
        %1005 = vmatpush1.msra.mxu0 0.0
        %1006 = vmatprep.subr.mxu0 0.0
        %1007 = vmatpush1.msra.mxu0 0.0
        %1008 = vmatprep.subr.mxu0 0.0
        %1009 = vmatpush1.msra.mxu0 0.0
        %1010 = vmatprep.subr.mxu0 0.0
        %1011 = vmatpush1.msra.mxu0 0.0
        %1012 = vmatprep.subr.mxu0 0.0
        %1013 = vmatpush1.msra.mxu0 0.0
        %1014 = vmatprep.subr.mxu0 0.0
        %1015 = vmatpush1.msra.mxu0 0.0
        %1016 = vmatprep.subr.mxu0 0.0
        %1017 = vmatpush1.msra.mxu0 0.0
        %1018 = vmatprep.subr.mxu0 0.0
        %1019 = vmatpush1.msra.mxu0 0.0
        %1020 = vmatprep.subr.mxu0 0.0
        %1021 = vmatpush1.msra.mxu0 0.0
        %1022 = vmatprep.subr.mxu0 0.0
        %1023 = vmatpush1.msra.mxu0 0.0
        %1024 = vmatprep.subr.mxu0 0.0
        %1025 = vmatpush1.msra.mxu0 0.0
        %1026 = vmatprep.subr.mxu0 0.0
        %1027 = vmatpush1.msra.mxu0 0.0
        %1028 = vmatprep.subr.mxu0 0.0
        %1029 = vmatpush1.msra.mxu0 %v997
        %1030 = vmatprep.subr.mxu0 0.0
        %1031 = vmatpush1.msra.mxu0 %v996
        %1032 = vmatprep.subr.mxu0 0.0
        %1033 = vmatpush1.msra.mxu0 %v995
        %1034 = vmatprep.subr.mxu0 0.0
        %1035 = vmatpush1.msra.mxu0 %v994
        %1036 = vmatprep.subr.mxu0 0.0
        %1037 = vmatpush2.msra.mxu0 0.0
        %1038 = vmatprep.subr.mxu0 0.0
        %1039 = vmatpush2.msra.mxu0 0.0
        %1040 = vmatprep.subr.mxu0 0.0
        %1041 = vmatpush2.msra.mxu0 0.0
        %1042 = vmatprep.subr.mxu0 0.0
        %1043 = vmatpush2.msra.mxu0 0.0
        %1044 = vmatprep.subr.mxu0 0.0
        %1045 = vmatpush2.msra.mxu0 0.0
        %1046 = vmatprep.subr.mxu0 0.0
        %1047 = vmatpush2.msra.mxu0 0.0
        %1048 = vmatprep.subr.mxu0 0.0
        %1049 = vmatpush2.msra.mxu0 0.0
        %1050 = vmatprep.subr.mxu0 0.0
        %1051 = vmatpush2.msra.mxu0 0.0
        %1052 = vmatprep.subr.mxu0 0.0
        %1053 = vmatpush2.msra.mxu0 0.0
        %1054 = vmatprep.subr.mxu0 0.0
        %1055 = vmatpush2.msra.mxu0 0.0
        %1056 = vmatprep.subr.mxu0 0.0
        %1057 = vmatpush2.msra.mxu0 0.0
        %1058 = vmatprep.subr.mxu0 0.0
        %1059 = vmatpush2.msra.mxu0 0.0
        %1060 = vmatprep.subr.mxu0 0.0
        %1061 = vmatpush2.msra.mxu0 0.0
        %1062 = vmatprep.subr.mxu0 0.0
        %1063 = vmatpush2.msra.mxu0 0.0
        %1064 = vmatprep.subr.mxu0 0.0
        %1065 = vmatpush2.msra.mxu0 0.0
        %1066 = vmatprep.subr.mxu0 0.0
        %1067 = vmatpush2.msra.mxu0 0.0
        %1068 = vmatprep.mubr.f32.mxu0 0.0
        %1069 = vmatmul.mubr.f32.gmra.mxu0 %v999
        %v1070 = vpop.f32.mrf.mxu0
        %v1071 = vadd.f32 0.0, %v1070
        %v1072 = vpop.f32.mrf.mxu0
        %1073 = vmatprep.mubr.f32.mxu0 0.0
        %1074 = vmatmul.mubr.f32.gmra.mxu0 %v1002
        %v1075 = vpop.f32.mrf.mxu0
        %v1076 = vadd.f32 0.0, %v1075
        %v1077 = vpop.f32.mrf.mxu0
        %1078 = vdwg.mxu0
        %v1079 = vadd.f32 %v916, %v1071
        %v1080 = vadd.f32 %v917, %v1076
        %v1081 = vld [vmem:[%s4] sm:$0x1]
        %v1083 = vlaneseq
        %v1084 = vshrl.u32 %v1083, 7
        %v1085 = vsub.s32 0, %v1084
        %v1086 = vrot.slane %v1081, %v1085
        %v1088 = vadd.f32 %v1079, %v1086
        %v1089 = vadd.f32 %v1080, %v1086
        %vm1090 = vcmask 523264
        %1091 = vst.msk [vmem:[%s325] sm:$0xff] %vm1090, %v1088
        %1092 = vst.msk [vmem:[%s325 + $0x8] sm:$0xff] %vm1090, %v1089
        %s1093 = sand.u32 %s162, 1
        %s1094 = scalar_lea.sflag [#allocation4], %s1093
        %s1095 = sand.u32 %s162, 1
        %s1096 = smul.addr %s1095, 16
        %s1097 = scalar_lea.vmem [#allocation9], %s1096
        // Predicated region
        $region57: #{tpu_custom_call.1} parent=39 // pred_check
          %p1098 = pneg %p172
        $region58: #{tpu_custom_call.1} parent=39 // pred_check_branch
          %1100 = sbr.rel (%p1098) target = $region60
        $region59: #{tpu_custom_call.1} parent=39 // pred_region
          %s1102 = ssub.s32 256, 256
          %1103 = vsyncadd %s1094, %s1102
          %s1104 = smul.addr %s27, 2
          %s1105 = sadd.s32 %s28, %s1104
          %s1106 = smul.addr %s1105, 128
          %s1107 = scalar_lea.hbm %s5, %s1106
          %s1108 = sshll.u32 %s1097, 4
          %s1109 = int_to_ptr.vmem [resolvable:$true] %s1108
          %1114 = dma.vmem_to_hbm [thread:$0]  %s1109, 256, %s1107, %s1094, 128, 128, 8
        $region60: #{tpu_custom_call.1} parent=39 // pred_fallthru
          _
      $region40: #{tpu_custom_call.1} parent=5 // pred_fallthru
        _
      %p1115 = scmp.le.s32.totalorder 2, %s18
      // Predicated region
      $region61: #{tpu_custom_call.1} parent=5 // pred_check
        %p1116 = pneg %p1115
      $region62: #{tpu_custom_call.1} parent=5 // pred_check_branch
        %1118 = sbr.rel (%p1116) target = $region64
      $region63: #{tpu_custom_call.1} parent=5 // pred_region
        %s1119 = ssub.s32 %s18, 2
        // Predicated region
        $region65: #{tpu_custom_call.1} parent=63 // pred_check
          %p1120 = pneg %p178
        $region66: #{tpu_custom_call.1} parent=63 // pred_check_branch
          %1122 = sbr.rel (%p1120) target = $region68
        $region67: #{tpu_custom_call.1} parent=63 // pred_region
          %s1123 = sand.u32 %s163, 1
          %s1124 = scalar_lea.sflag [#allocation4], %s1123
          %s1125 = sand.u32 %s163, 1
          %s1126 = smul.addr %s1125, 16
          %s1127 = scalar_lea.vmem [#allocation9], %s1126
          %1128 = dma.done %s1124, 256
        $region68: #{tpu_custom_call.1} parent=63 // pred_fallthru
          _
      $region64: #{tpu_custom_call.1} parent=5 // pred_fallthru
        _
    $region6: #{tpu_custom_call.1} parent=1 // loop_footer
      %s22 = sadd.s32 1, %s18
    $region7: #{tpu_custom_call.1} parent=1 // loop_footer_branch
      %17 = sbr.rel target = $region3
    $region8: #{tpu_custom_call.1} parent=1 // loop_exit
      _
    %1129 = vsyncpa [#allocation3], 1
    %s1130 = scalar_lea.sflag [#allocation3], 1
    %1131 = vsyncpa %s1130, 1
    %1132 = vsyncpa [#allocation6], 1
    %1133 = vsyncpa [#allocation4], 1
    %s1134 = scalar_lea.sflag [#allocation4], 1
    %1135 = vsyncpa %s1134, 1

</llo_original>
